<compile_context>
chip_gen: v7x
topology: tpu7x:2x2x1
jax: 0.10.0
libtpu: 0.0.40
codegen_flags: <defaults>
</compile_context>

<pallas_src>
import math
from functools import partial

import jax
import jax.numpy as jnp
from jax.experimental import pallas as pl
from jax.experimental.pallas import tpu as pltpu


_TARGET_BLOCK_BYTES = 4 * 1024 * 1024   # ~4 MiB x/out blocks (~85%+ of HBM roofline)
_MAX_LANE_TILE = 8192                   # bound lane width so row_tile >= sublane quantum
_VMEM_LIMIT_BYTES = 32 * 1024 * 1024    # covers double-buffered in+out on v5e; <= v6e/v7x default


def _ceil_div(a, b):
    return -(-a // b)


def _pick_tiles(rows, lanes, itemsize):
    """Byte-targeted tile selection (ragged last blocks allowed, so no divisor hunt).

    lane_tile: full axis if it fits under the cap, else widest multiple of 128.
    row_tile : full axis if it fits the byte budget, else largest multiple of the
               dtype sublane quantum (8 f32 / 16 bf16 / 32 int8) under the budget.
    """
    quantum = max(8, 32 // itemsize)
    max_lane = max(128, min(_MAX_LANE_TILE, _TARGET_BLOCK_BYTES // (quantum * itemsize)))
    if lanes <= max_lane:
        lane_tile = lanes                       # full axis -> always a legal block dim
    else:
        lane_tile = (max_lane // 128) * 128     # unmasked, lane-dense stores
    row_cap = max(quantum, _TARGET_BLOCK_BYTES // (lane_tile * itemsize))
    if rows <= row_cap:
        row_tile = rows                         # full axis
    else:
        row_tile = (row_cap // quantum) * quantum
    return row_tile, lane_tile, quantum


def _pe_add_kernel(x_ref, facph_ref, out_ref, *, row_tile, row_axis):
    # x_ref/out_ref: (row_tile, lane_tile); facph_ref: (2, lane_tile) f32
    #   row 0 = per-lane frequency factor, row 1 = per-lane phase (0 or pi/2).
    # Position is a (row_tile, 1) column; the multiply against the factor row does
    # the lane broadcast, so iota/cast work is ~1/lane_tile of a full-tile iota.
    row0 = pl.program_id(row_axis) * row_tile
    pos = (row0 + jax.lax.broadcasted_iota(jnp.int32, (x_ref.shape[0], 1), 0)
           ).astype(jnp.float32)
    fac = facph_ref[0:1, :]
    ph = facph_ref[1:2, :]
    # Single transcendental per element: pi/2 phase on odd lanes turns sin into cos.
    pe = jnp.sin(pos * fac + ph)
    out_ref[...] = (x_ref[...].astype(jnp.float32) + pe).astype(out_ref.dtype)


def positional_encoding(x, *, batch_first=False, max_len=500):
    """Forward of PositionalEncoding in eval mode. x: (S, B, D) or (B, S, D)."""
    # TODO(synk): nn.Dropout(p=0.1) is applied as inference-mode identity (a training-mode
    # mask would need pltpu.prng_seed / prng_random_bits in-kernel).
    assert x.ndim == 3, "expected (seq, batch, dim) or (batch, seq, dim)"
    if batch_first:
        B, S, D = x.shape
    else:
        S, B, D = x.shape
    assert D % 2 == 0, "dim must be even"
    assert S <= max_len, f"sequence length {S} exceeds max_len={max_len}"

    # --- buffer setup (mirrors register_buffer('pe', ...) in __init__) -------
    half = jnp.exp(jnp.arange(0, D, 2, dtype=jnp.float32) * (-math.log(10000.0) / D))
    fac_d = jnp.repeat(half, 2)                                             # f0,f0,f1,f1,...
    ph_d = jnp.tile(jnp.array([0.0, math.pi / 2.0], jnp.float32), D // 2)   # 0,pi/2,0,pi/2,...

    itemsize = jnp.dtype(x.dtype).itemsize

    if batch_first:
        # Keep x 3-D: grid (lane, batch, seq) with a squeezed batch block, so the
        # sequence position is program_id(2)*row_tile + iota (no per-element rem).
        rows, lanes = S, D
        row_tile, lane_tile, quantum = _pick_tiles(rows, lanes, itemsize)
        lane_blocks = _ceil_div(lanes, lane_tile)
        row_blocks = _ceil_div(rows, row_tile)
        if lane_blocks * B * row_blocks < 2 and rows > quantum:
            # v7x has 2 TensorCores; make sure a 'parallel' axis has >= 2 blocks.
            row_tile = quantum * _ceil_div(_ceil_div(rows, 2), quantum)
            row_blocks = _ceil_div(rows, row_tile)
        facph = jnp.stack([fac_d, ph_d], axis=0)                            # (2, D)
        grid = (lane_blocks, B, row_blocks)
        x_spec = pl.BlockSpec((None, row_tile, lane_tile), lambda j, b, i: (b, i, j))
        facph_spec = pl.BlockSpec((2, lane_tile), lambda j, b, i: (0, j))
        out_shape = jax.ShapeDtypeStruct((B, S, D), x.dtype)
        row_axis = 2
        x_in = x
    else:
        # Lane-dense slab: (S, B, D) -> (S, B*D); pe broadcasts over batch, so
        # factor/phase are tiled B times along lanes.
        # TODO(synk): on v7x, if EUP/VALU ever binds, compute sin over D lanes once
        # and tile the result B times in-register instead of recomputing per batch.
        rows, lanes = S, B * D
        row_tile, lane_tile, quantum = _pick_tiles(rows, lanes, itemsize)
        lane_blocks = _ceil_div(lanes, lane_tile)
        row_blocks = _ceil_div(rows, row_tile)
        if lane_blocks * row_blocks < 2 and rows > quantum:
            row_tile = quantum * _ceil_div(_ceil_div(rows, 2), quantum)
            row_blocks = _ceil_div(rows, row_tile)
        facph = jnp.stack([jnp.tile(fac_d, B), jnp.tile(ph_d, B)], axis=0)  # (2, B*D)
        grid = (lane_blocks, row_blocks)
        x_spec = pl.BlockSpec((row_tile, lane_tile), lambda j, i: (i, j))
        facph_spec = pl.BlockSpec((2, lane_tile), lambda j, i: (0, j))
        out_shape = jax.ShapeDtypeStruct((rows, lanes), x.dtype)
        row_axis = 1
        x_in = x.reshape(rows, lanes)   # row-major flatten: lane-dense view

    kernel = partial(_pe_add_kernel, row_tile=row_tile, row_axis=row_axis)

    out = pl.pallas_call(
        kernel,
        out_shape=out_shape,
        grid_spec=pltpu.PrefetchScalarGridSpec(
            num_scalar_prefetch=0,
            grid=grid,
            in_specs=[x_spec, facph_spec],   # lane axis is the SLOW grid dim, so the
            out_specs=x_spec,                # (2, lane_tile) constant block is fetched
        ),                                   # once per lane block, not per step.
        compiler_params=pltpu.CompilerParams(
            dimension_semantics=("parallel",) * len(grid),
            vmem_limit_bytes=_VMEM_LIMIT_BYTES,
        ),
    )(x_in, facph)

    if batch_first:
        return out
    return out.reshape(x.shape)


def positional_encoding_ref(x, *, batch_first=False, max_len=500):
    """Pure-JAX reference replicating the PyTorch forward (dropout in eval mode)."""
    D = x.shape[-1]
    position = jnp.arange(max_len, dtype=jnp.float32)[:, None]
    factor = jnp.exp(jnp.arange(0, D, 2, dtype=jnp.float32) * (-math.log(10000.0) / D))
    pe = jnp.zeros((max_len, D), jnp.float32)
    pe = pe.at[:, 0::2].set(jnp.sin(position * factor))
    pe = pe.at[:, 1::2].set(jnp.cos(position * factor))
    if batch_first:
        return (x + pe[None, : x.shape[1], :]).astype(x.dtype)
    return (x + pe[: x.shape[0], None, :]).astype(x.dtype)


if __name__ == "__main__":
    key = jax.random.PRNGKey(0)

    # --- small shapes, default (seq, batch, dim) layout -----------------------
    S, B, D = 8, 2, 32
    x = jax.random.normal(key, (S, B, D), dtype=jnp.float32)
    out = jax.block_until_ready(positional_encoding(x, batch_first=False))
    ref = positional_encoding_ref(x, batch_first=False)
    assert out.shape == x.shape
    err = float(jnp.max(jnp.abs(out - ref)))
    assert jnp.allclose(out, ref, atol=1e-5, rtol=1e-5), f"max abs err = {err}"

    # batch_first layout: (batch, seq, dim).
    xb = jnp.transpose(x, (1, 0, 2))
    outb = jax.block_until_ready(positional_encoding(xb, batch_first=True))
    refb = positional_encoding_ref(xb, batch_first=True)
    errb = float(jnp.max(jnp.abs(outb - refb)))
    assert jnp.allclose(outb, refb, atol=1e-5, rtol=1e-5), f"max abs err = {errb}"

    # --- shape that exercises the megacore row split and a ragged last block ---
    S2, B2, D2 = 20, 3, 128
    x2 = jax.random.normal(jax.random.fold_in(key, 1), (S2, B2, D2), dtype=jnp.float32)
    out2 = jax.block_until_ready(positional_encoding(x2, batch_first=False))
    ref2 = positional_encoding_ref(x2, batch_first=False)
    err2 = float(jnp.max(jnp.abs(out2 - ref2)))
    assert jnp.allclose(out2, ref2, atol=1e-5, rtol=1e-5), f"max abs err = {err2}"

    x2b = jnp.transpose(x2, (1, 0, 2))
    out2b = jax.block_until_ready(positional_encoding(x2b, batch_first=True))
    ref2b = positional_encoding_ref(x2b, batch_first=True)
    err2b = float(jnp.max(jnp.abs(out2b - ref2b)))
    assert jnp.allclose(out2b, ref2b, atol=1e-5, rtol=1e-5), f"max abs err = {err2b}"

    print("KERNEL_OK")
</pallas_src>

<mosaic_0001>
module attributes {stable_mosaic.version = 11 : i64} {
  func.func @_pe_add_kernel(%arg0: i32, %arg1: i32, %arg2: memref<8x64xf32, #tpu.memory_space<vmem>>, %arg3: memref<2x64xf32, #tpu.memory_space<vmem>>, %arg4: memref<8x64xf32, #tpu.memory_space<vmem>>) attributes {dimension_semantics = [#tpu.dimension_semantics<parallel>, #tpu.dimension_semantics<parallel>], iteration_bounds = array<i64: 1, 1>, scalar_prefetch = 0 : i64, scratch_operands = 0 : i64, tpu.core_type = #tpu.core_type<tc>, window_params = [{transform_indices = @transform_0, window_bounds = array<i64: 8, 64>}, {transform_indices = @transform_1, window_bounds = array<i64: 2, 64>}, {transform_indices = @transform_2, window_bounds = array<i64: 8, 64>}]} {
    %c8_i32 = arith.constant 8 : i32
    %0 = arith.muli %arg1, %c8_i32 : i32
    %1 = tpu.iota {dimensions = array<i32: 0>} : vector<8x1xi32>
    %2 = vector.broadcast %0 : i32 to vector<8x1xi32>
    %3 = arith.addi %2, %1 : vector<8x1xi32>
    %4 = arith.sitofp %3 : vector<8x1xi32> to vector<8x1xf32>
    %c0 = arith.constant 0 : index
    %c0_0 = arith.constant 0 : index
    %5 = vector.load %arg3[%c0, %c0_0] : memref<2x64xf32, #tpu.memory_space<vmem>>, vector<1x64xf32>
    %c1 = arith.constant 1 : index
    %c0_1 = arith.constant 0 : index
    %6 = vector.load %arg3[%c1, %c0_1] : memref<2x64xf32, #tpu.memory_space<vmem>>, vector<1x64xf32>
    %7 = vector.broadcast %4 : vector<8x1xf32> to vector<8x64xf32>
    %8 = vector.broadcast %5 : vector<1x64xf32> to vector<8x64xf32>
    %9 = arith.mulf %7, %8 : vector<8x64xf32>
    %10 = vector.broadcast %6 : vector<1x64xf32> to vector<8x64xf32>
    %11 = arith.addf %9, %10 : vector<8x64xf32>
    %12 = math.sin %11 : vector<8x64xf32>
    %c0_2 = arith.constant 0 : index
    %c0_3 = arith.constant 0 : index
    %13 = vector.load %arg2[%c0_2, %c0_3] : memref<8x64xf32, #tpu.memory_space<vmem>>, vector<8x64xf32>
    %14 = arith.addf %13, %12 : vector<8x64xf32>
    %c0_4 = arith.constant 0 : index
    %c0_5 = arith.constant 0 : index
    %15 = vector.load %arg4[%c0_4, %c0_5] : memref<8x64xf32, #tpu.memory_space<vmem>>, vector<8x64xf32>
    tpu.vector_store %arg4[%c0_4, %c0_5], %14 {strides = array<i32>} : memref<8x64xf32, #tpu.memory_space<vmem>>, vector<8x64xf32>,
    return
  }
  func.func @transform_0(%arg0: i32, %arg1: i32) -> (i32, i32) {
    %c0_i32 = arith.constant 0 : i32
    return %arg1, %arg0 : i32, i32
  }
  func.func @transform_1(%arg0: i32, %arg1: i32) -> (i32, i32) {
    %c0_i32 = arith.constant 0 : i32
    %c0_i32_0 = arith.constant 0 : i32
    return %c0_i32, %arg0 : i32, i32
  }
  func.func @transform_2(%arg0: i32, %arg1: i32) -> (i32, i32) {
    %c0_i32 = arith.constant 0 : i32
    return %arg1, %arg0 : i32, i32
  }
}

</mosaic_0001>

<llo_original>
// kernel: tpu_custom_call.1
$region0: #{tpu_custom_call.1}
  #allocation0 [shape = 'u32[]', space=smem, size = 0x4, offset = 0x4, fixed_abs, tag = 'smem constant byte address 0x4 - core index']
  #allocation1 [shape = 'u32[144,128]{1,0:T(1,128)}', space=vmem, size = 0x12000, scoped, tag = 'internal scratch']
  %s0 = inlined_call_operand.hbm [shape: f32[8,64], index: 0, kind: input, shape index: {}]
  %s1 = inlined_call_operand.vmem [shape: f32[2,64], index: 1, kind: input, shape index: {}]
  %s2 = inlined_call_operand.hbm [shape: f32[8,64], index: 2, kind: output, shape index: {}]
  %s3 = sld [smem:[#allocation0]]
  $region22: #{tpu_custom_call.1} parent=0
    _
  %s5 = ssub.s32 1, %s3
  %s6 = scalar_select 0, %s5, %s3
  $region1: #{tpu_custom_call.1} parent=0
    #allocation2 [shape = 'u8[4096]{0}', space=vmem, size = 0x1000, scoped, tag = 'input window, operand 0, single buffered']
    #allocation3 [shape = 's32[1]{0}', space=sflag, size = 0x4, scoped, tag = 'scoped memory for tpu_custom_call.1']
    #allocation4 [shape = 's32[1]{0}', space=sflag, size = 0x4, scoped, tag = 'scoped memory for tpu_custom_call.1']
    #allocation5 [shape = 'u8[4096]{0}', space=vmem, size = 0x1000, scoped, tag = 'output window, operand 0, single buffered']
    %7 = vsyncpa [#allocation3], 0
    %8 = vsyncpa [#allocation4], 0
    // Predicated region
    $region2: #{tpu_custom_call.1} parent=1 // pred_check
      _
    $region3: #{tpu_custom_call.1} parent=1 // pred_check_branch
      %10 = sbr.rel (0) target = $region5
    $region4: #{tpu_custom_call.1} parent=1 // pred_region
      %s12 = ssub.s32 128, 128
      %13 = vsyncadd [#allocation3], %s12
      %s15 = sshll.u32 [#allocation2], 4
      %s16 = int_to_ptr.vmem [resolvable:$true] %s15
      %18 = dma.hbm_to_vmem [thread:$0]  %s0, 128, %s16, [#allocation3]
    $region5: #{tpu_custom_call.1} parent=1 // pred_fallthru
      _
    // Predicated region
    $region6: #{tpu_custom_call.1} parent=1 // pred_check
      _
    $region7: #{tpu_custom_call.1} parent=1 // pred_check_branch
      %20 = sbr.rel (0) target = $region9
    $region8: #{tpu_custom_call.1} parent=1 // pred_region
      _
    $region9: #{tpu_custom_call.1} parent=1 // pred_fallthru
      _
    // Predicated region
    $region10: #{tpu_custom_call.1} parent=1 // pred_check
      _
    $region11: #{tpu_custom_call.1} parent=1 // pred_check_branch
      %22 = sbr.rel (0) target = $region13
    $region12: #{tpu_custom_call.1} parent=1 // pred_region
      %23 = dma.done [#allocation3], 128
    $region13: #{tpu_custom_call.1} parent=1 // pred_fallthru
      _
    %s24 = smul.u32 0, 8
    %v25 = vlaneseq
    %v26 = vshrl.u32 %v25, 7
    %v27 = vstv %s24
    %v28 = vadd.s32 %v27, %v26
    %v29 = vcvt.s32.f32 %v28
    %v30 = vld [vmem:[%s1] sm:$0x1]
    %v31 = vld [vmem:[%s1 + $0x1] sm:$0x1]
    %v32 = vlaneseq
    %v33 = vshrl.u32 %v32, 7
    %v34 = vsub.s32 0, %v33
    %v35 = vrot.slane %v30, %v34
    %v36 = vmul.f32 %v29, %v35
    %v37 = vlaneseq
    %v38 = vshrl.u32 %v37, 7
    %v39 = vsub.s32 0, %v38
    %v40 = vrot.slane %v31, %v39
    %v41 = vadd.f32 %v36, %v40
    %v42 = vand.u32 2147483647, %v41
    %vm43 = vcmp.le.f32.partialorder %v42, 0.7853982
    %vm44 = vcmp.lt.s32.totalorder %v41, 0
    %v45 = vand.u32 %v41, 2139095040
    %v46 = vshrl.u32 %v45, 23
    %v47 = vsub.s32 %v46, 127
    %v48 = vand.u32 2147483647, %v41
    %v49 = vand.u32 %v48, 8388607
    %v50 = vor.u32 %v49, 8388608
    %v51 = vsub.s32 0, %v50
    %v52 = vadd.s32 %v47, 1
    %vm53 = vcmp.gt.s32.totalorder %v52, 0
    %v54 = vsel %vm53, %v52, 0
    %v55 = vshrl.u32 %v54, 5
    %v56 = vand.u32 %v54, 31
    %v57 = vsub.s32 32, %v56
    %v58 = vshrl.u32 683565275, %v57
    %v59 = vshll.u32 683565275, %v56
    %v60 = vshrl.u32 2475754826, %v57
    %v61 = vor.u32 %v59, %v60
    %v62 = vshll.u32 2475754826, %v56
    %v63 = vshrl.u32 2131351028, %v57
    %v64 = vor.u32 %v62, %v63
    %v65 = vshll.u32 2131351028, %v56
    %v66 = vshrl.u32 2102212464, %v57
    %v67 = vor.u32 %v65, %v66
    %v68 = vshll.u32 2102212464, %v56
    %v69 = vshrl.u32 920167782, %v57
    %v70 = vor.u32 %v68, %v69
    %v71 = vshll.u32 920167782, %v56
    %v72 = vshrl.u32 1326507024, %v57
    %v73 = vor.u32 %v71, %v72
    %vm74 = vcmp.lt.s32.totalorder %v55, 1
    %vm75 = vcmp.lt.s32.totalorder %v55, 2
    %vm76 = vcmp.lt.s32.totalorder %v55, 3
    %vm77 = vcmp.lt.s32.totalorder %v55, 4
    %v78 = vsel %vm74, %v58, %v61
    %v79 = vsel %vm77, %v67, 2102212464
    %v80 = vsel %vm76, %v64, %v79
    %v81 = vsel %vm75, %v78, %v80
    %v82 = vsel %vm74, %v61, %v64
    %v83 = vsel %vm77, %v70, 920167782
    %v84 = vsel %vm76, %v67, %v83
    %v85 = vsel %vm75, %v82, %v84
    %v86 = vsel %vm74, %v64, %v67
    %v87 = vsel %vm77, %v73, 1326507024
    %v88 = vsel %vm76, %v70, %v87
    %v89 = vsel %vm75, %v86, %v88
    %v90 = vshll.u32 %v50, 8
    %v91 = vmul.u32.u64.compose %v90, %v89
    %v92 = vextract.low.u32 %v91
    %v93 = vextract.high.u32 %v91
    %v94 = vmul.u32.u64.compose %v90, %v85
    %v95 = vextract.low.u32 %v94
    %v96 = vextract.high.u32 %v94
    %v97 = vmul.u32 %v90, %v81
    %v98 = vadd.s32 %v93, %v95
    %vm99 = vc.u32 %v93, %v95
    %v100 = vadd.s32 %v96, 1
    %v101 = vsel %vm99, %v100, %v96
    %v102 = vadd.s32 %v97, %v101
    %v103 = vadd.s32 %v102, 536870912
    %v104 = vshrl.u32 %v103, 30
    %v105 = vshll.u32 %v104, 30
    %v106 = vsub.s32 %v102, %v105
    %vm107 = vcmp.lt.s32.totalorder %v106, 0
    %v108 = vsub.s32 0, %v106
    %v109 = vsel %vm107, %v108, %v106
    %v110 = vclz %v109
    %v111 = vsub.s32 %v110, 2
    %vm112 = vcmp.gt.s32.totalorder 0, %v111
    %v113 = vsel %vm112, 0, %v111
    %v114 = vsub.s32 32, %v113
    %v115 = vshll.u32 %v106, %v113
    %v116 = vshrl.u32 %v98, %v114
    %v117 = vor.u32 %v115, %v116
    %v118 = vsub.s32 4294967266, %v113
    %v119 = vadd.s32 %v118, 127
    %v120 = vshll.u32 %v119, 23
    %v121 = vor.u32 4788187, %v120
    %v122 = vand.u32 2147483647, %v121
    %v124 = vcvt.s32.f32 %v117
    %v125 = vmul.f32 %v124, %v122
    %v126 = vxor.u32 %v125, 2147483648
    %v127 = vsel %vm44, %v126, %v125
    %v128 = vsub.s32 4, %v104
    %v129 = vsel %vm44, %v128, %v104
    %v130 = vsel %vm43, %v41, %v127
    %v131 = vsel %vm43, 0, %v129
    %v132 = vcosq.f32.pop %v130
    %v133 = vsinq.f32.pop %v130
    %vm134 = vweird.f32 %v41
    %v135 = vadd.s32 %v131, 3
    %v136 = vand.u32 %v135, 3
    %vm137 = vcmp.lt.s32.totalorder %v136, 2
    %vm138 = vcmp.eq.s32.totalorder %v136, 0
    %v139 = vxor.u32 %v133, 2147483648
    %v140 = vsel %vm138, %v132, %v139
    %vm141 = vcmp.eq.s32.totalorder %v136, 2
    %v142 = vxor.u32 %v132, 2147483648
    %v143 = vsel %vm141, %v142, %v133
    %v144 = vsel %vm137, %v140, %v143
    %v145 = vsel %vm134, nan, %v144
    %v146 = vld [vmem:[#allocation2] sm:$0xff]
    %v147 = vadd.f32 %v146, %v145
    %vm148 = vcmask 523264
    %149 = vst.msk [vmem:[#allocation5] sm:$0xff] %vm148, %v147
    // Predicated region
    $region14: #{tpu_custom_call.1} parent=1 // pred_check
      _
    $region15: #{tpu_custom_call.1} parent=1 // pred_check_branch
      %151 = sbr.rel (0) target = $region17
    $region16: #{tpu_custom_call.1} parent=1 // pred_region
      %s153 = ssub.s32 128, 128
      %154 = vsyncadd [#allocation4], %s153
      %s156 = sshll.u32 [#allocation5], 4
      %s157 = int_to_ptr.vmem [resolvable:$true] %s156
      %159 = dma.vmem_to_hbm [thread:$0]  %s157, 128, %s2, [#allocation4]
    $region17: #{tpu_custom_call.1} parent=1 // pred_fallthru
      _
    // Predicated region
    $region18: #{tpu_custom_call.1} parent=1 // pred_check
      _
    $region19: #{tpu_custom_call.1} parent=1 // pred_check_branch
      %161 = sbr.rel (0) target = $region21
    $region20: #{tpu_custom_call.1} parent=1 // pred_region
      %162 = dma.done [#allocation4], 128
    $region21: #{tpu_custom_call.1} parent=1 // pred_fallthru
      _
    %163 = vsyncpa [#allocation3], 1
    %164 = vsyncpa [#allocation4], 1

</llo_original>
